<compile_context>
chip_gen: v6e
topology: v6e:2x2x1
jax: 0.10.0
libtpu: 0.0.40
codegen_flags: <defaults>
</compile_context>

<pallas_src>
import numpy as np
import jax
import jax.numpy as jnp
from jax.experimental import pallas as pl
from jax.experimental.pallas import tpu as pltpu

F32 = jnp.float32
BF16 = jnp.bfloat16
HIDDEN = 128   # true lane-dense hidden width (no dead MXU lanes on the hot path)
IN_PAD = 128   # in_dim (16) zero-padded only for the single x @ W_atom matmul


# ----------------------------------------------------------------------------
# Pallas kernel: whole ALIGNNLayer forward, single grid point (arrays fit VMEM)
# ----------------------------------------------------------------------------
def alignn_layer_kernel(x_ref, Aa_ref, Ab_ref, M_ref, MTh_ref,
                        Wa_ref, ba_ref, Wb_ref, bb_ref,
                        Wba_ref, bba_ref, Wab_ref, bab_ref,
                        xa_out_ref, xb_out_ref):
    # Every MXU feed below is bf16 x bf16; accumulation is f32 via
    # preferred_element_type, so the only error source is operand rounding.

    # conv_atom: GCNConv on atoms -> relu
    xw = jnp.dot(x_ref[...].astype(BF16), Wa_ref[...],
                 preferred_element_type=F32).astype(BF16)
    x_atom = jnp.maximum(
        jnp.dot(Aa_ref[...], xw, preferred_element_type=F32) + ba_ref[...], 0.0)

    # x_bond = (x_atom[row] + x_atom[col]) / 2  ==  MT_half @ x_atom
    # (MT_half shipped pre-transposed & pre-scaled: canonical last-dim
    #  contraction, no in-kernel transpose, no extra 0.5 VPU multiply)
    x_bond0 = jnp.dot(MTh_ref[...], x_atom.astype(BF16),
                      preferred_element_type=F32)

    # conv_bond: GCNConv on bonds (line graph) -> relu
    xbw = jnp.dot(x_bond0.astype(BF16), Wb_ref[...],
                  preferred_element_type=F32).astype(BF16)
    x_bond = jnp.maximum(
        jnp.dot(Ab_ref[...], xbw, preferred_element_type=F32) + bb_ref[...], 0.0)

    # bond_to_atom Linear, scatter-add to both endpoints:  M @ b2a
    b2a = (jnp.dot(x_bond.astype(BF16), Wba_ref[...],
                   preferred_element_type=F32) + bba_ref[...]).astype(BF16)
    x_atom_new = x_atom + jnp.dot(M_ref[...], b2a, preferred_element_type=F32)

    # atom_to_bond Linear -> relu -> gather/average to bonds -> residual add
    a2b = jnp.maximum(
        jnp.dot(x_atom_new.astype(BF16), Wab_ref[...],
                preferred_element_type=F32) + bab_ref[...], 0.0)
    x_bond_new = x_bond + jnp.dot(MTh_ref[...], a2b.astype(BF16),
                                  preferred_element_type=F32)

    xa_out_ref[...] = x_atom_new          # [N, 128] lane-dense unmasked store
    xb_out_ref[...] = x_bond_new          # [E, 128] lane-dense unmasked store


def alignn_layer_pallas(x_pad, Aa, Ab, M, MTh, p):
    N, E = M.shape
    vmem = pl.BlockSpec(memory_space=pltpu.MemorySpace.VMEM)
    return pl.pallas_call(
        alignn_layer_kernel,
        out_shape=(jax.ShapeDtypeStruct((N, HIDDEN), F32),
                   jax.ShapeDtypeStruct((E, HIDDEN), F32)),
        in_specs=[vmem] * 13,
        out_specs=(vmem, vmem),
    )(x_pad, Aa, Ab, M, MTh,
      p["W_atom"], p["b_atom"], p["W_bond"], p["b_bond"],
      p["W_b2a"], p["b_b2a"], p["W_a2b"], p["b_a2b"])


# ----------------------------------------------------------------------------
# Glue: densify graph structure (plain numpy, no hot-path compute)
# ----------------------------------------------------------------------------
def gcn_norm_dense(src, dst, n):
    """Dense symmetric-normalized adjacency with self loops (PyG GCNConv norm)."""
    A = np.zeros((n, n), np.float32)
    np.add.at(A, (dst, src), 1.0)
    A += np.eye(n, dtype=np.float32)
    deg = A.sum(axis=1)
    dinv = 1.0 / np.sqrt(deg)
    return (dinv[:, None] * A) * dinv[None, :]


def incidence_dense(row, col, n, e):
    M = np.zeros((n, e), np.float32)
    np.add.at(M, (row, np.arange(e)), 1.0)
    np.add.at(M, (col, np.arange(e)), 1.0)
    return M


def build_graph(num_graphs=2, nodes_per_graph=8):
    rows, cols = [], []
    for g in range(num_graphs):
        off = g * nodes_per_graph
        for i in range(nodes_per_graph):
            u, v = off + i, off + (i + 1) % nodes_per_graph
            rows += [u, v]
            cols += [v, u]
    row = np.array(rows, np.int32)
    col = np.array(cols, np.int32)
    E = len(row)
    # line graph: bond e -> bond f if target(e) == source(f), e != f
    lr, lc = [], []
    for e in range(E):
        for f in range(E):
            if e != f and col[e] == row[f]:
                lr.append(e)
                lc.append(f)
    return row, col, np.array(lr, np.int32), np.array(lc, np.int32)


# ----------------------------------------------------------------------------
# Pure-JAX reference mirroring the PyTorch forward exactly (gather/scatter)
# ----------------------------------------------------------------------------
def gcn_conv_ref(x, edge_index, W, b):
    n = x.shape[0]
    src, dst = edge_index
    src = jnp.concatenate([src, jnp.arange(n, dtype=src.dtype)])
    dst = jnp.concatenate([dst, jnp.arange(n, dtype=dst.dtype)])
    deg = jnp.zeros((n,), F32).at[dst].add(1.0)
    dinv = 1.0 / jnp.sqrt(deg)
    norm = dinv[src] * dinv[dst]
    xw = x @ W
    out = jnp.zeros((n, W.shape[1]), F32).at[dst].add(xw[src] * norm[:, None])
    return out + b[0]


def alignn_layer_ref(x, edge_index, lg_edge_index, p):
    x_atom = jax.nn.relu(gcn_conv_ref(x, edge_index, p["W_atom"], p["b_atom"]))
    row, col = edge_index
    x_bond = (x_atom[row] + x_atom[col]) / 2.0
    x_bond = jax.nn.relu(gcn_conv_ref(x_bond, lg_edge_index, p["W_bond"], p["b_bond"]))
    b2a = x_bond @ p["W_b2a"] + p["b_b2a"][0]
    atom_msg = jnp.zeros_like(x_atom).at[row].add(b2a).at[col].add(b2a)
    x_atom = x_atom + atom_msg
    a2b = jax.nn.relu(x_atom @ p["W_a2b"] + p["b_a2b"][0])
    x_bond = x_bond + (a2b[row] + a2b[col]) / 2.0
    return x_atom, x_bond


# ----------------------------------------------------------------------------
# Deterministic params + kernel-side (bf16 weight / padded) versions
# ----------------------------------------------------------------------------
def init_params(key, in_dim, hidden):
    ks = jax.random.split(key, 8)
    w = lambda k, a, b: jax.random.normal(k, (a, b), F32) / np.sqrt(a)
    bv = lambda k, b: 0.1 * jax.random.normal(k, (1, b), F32)
    return dict(
        W_atom=w(ks[0], in_dim, hidden),  b_atom=bv(ks[1], hidden),
        W_bond=w(ks[2], hidden, hidden),  b_bond=bv(ks[3], hidden),
        W_b2a=w(ks[4], hidden, hidden),   b_b2a=bv(ks[5], hidden),
        W_a2b=w(ks[6], hidden, hidden),   b_a2b=bv(ks[7], hidden),
    )


def prep_params(p):
    """bf16 weights for the MXU; only W_atom's contraction dim needs zero-pad."""
    W_atom = jnp.zeros((IN_PAD, HIDDEN), F32).at[:p["W_atom"].shape[0]].set(p["W_atom"])
    return dict(
        W_atom=W_atom.astype(BF16),        b_atom=p["b_atom"],
        W_bond=p["W_bond"].astype(BF16),   b_bond=p["b_bond"],
        W_b2a=p["W_b2a"].astype(BF16),     b_b2a=p["b_b2a"],
        W_a2b=p["W_a2b"].astype(BF16),     b_a2b=p["b_a2b"],
    )


if __name__ == "__main__":
    in_dim, hidden = 16, HIDDEN
    num_graphs, nodes_per_graph = 2, 8

    row, col, lrow, lcol = build_graph(num_graphs, nodes_per_graph)
    N = num_graphs * nodes_per_graph      # 16 atoms
    E = len(row)                          # 32 bonds (directed edges)

    key = jax.random.PRNGKey(0)
    key, kx = jax.random.split(key)
    x = jax.random.normal(kx, (N, in_dim), F32)
    params = init_params(key, in_dim, hidden)

    # densified structure matrices, stored bf16 (f32 accumulation inside kernel)
    Aa = jnp.asarray(gcn_norm_dense(row, col, N)).astype(BF16)
    Ab = jnp.asarray(gcn_norm_dense(lrow, lcol, E)).astype(BF16)
    M_np = incidence_dense(row, col, N, E)
    M = jnp.asarray(M_np).astype(BF16)                     # entries {0,1,2} exact
    MTh = jnp.asarray((0.5 * M_np).T).astype(BF16)         # entries {0,.5,1} exact

    # in_dim padded to 128 for the single input matmul; hidden is a true 128
    x_pad = jnp.zeros((N, IN_PAD), F32).at[:, :in_dim].set(x)
    pp = prep_params(params)

    # ---- Pallas fused forward (single kernel launch) ----
    xa, xb = alignn_layer_pallas(x_pad, Aa, Ab, M, MTh, pp)
    xa = jax.block_until_ready(xa)
    xb = jax.block_until_ready(xb)

    # ---- reference forward (pure JAX, index-based, mirrors PyTorch) ----
    ei = (jnp.asarray(row), jnp.asarray(col))
    lei = (jnp.asarray(lrow), jnp.asarray(lcol))
    xa_ref, xb_ref = alignn_layer_ref(x, ei, lei, params)

    # bf16 operands (adjacency, weights, activations) -> ~1e-2 worst-case error;
    # all accumulation is f32.
    np.testing.assert_allclose(np.asarray(xa), np.asarray(xa_ref), rtol=2e-2, atol=2e-2)
    np.testing.assert_allclose(np.asarray(xb), np.asarray(xb_ref), rtol=2e-2, atol=2e-2)
    print("KERNEL_OK")
</pallas_src>

<mosaic_0001>
module attributes {stable_mosaic.version = 11 : i64} {
  func.func @alignn_layer_kernel(%arg0: memref<16x128xf32, #tpu.memory_space<vmem>>, %arg1: memref<16x16xbf16, #tpu.memory_space<vmem>>, %arg2: memref<32x32xbf16, #tpu.memory_space<vmem>>, %arg3: memref<16x32xbf16, #tpu.memory_space<vmem>>, %arg4: memref<32x16xbf16, #tpu.memory_space<vmem>>, %arg5: memref<128x128xbf16, #tpu.memory_space<vmem>>, %arg6: memref<1x128xf32, #tpu.memory_space<vmem>>, %arg7: memref<128x128xbf16, #tpu.memory_space<vmem>>, %arg8: memref<1x128xf32, #tpu.memory_space<vmem>>, %arg9: memref<128x128xbf16, #tpu.memory_space<vmem>>, %arg10: memref<1x128xf32, #tpu.memory_space<vmem>>, %arg11: memref<128x128xbf16, #tpu.memory_space<vmem>>, %arg12: memref<1x128xf32, #tpu.memory_space<vmem>>, %arg13: memref<16x128xf32, #tpu.memory_space<vmem>>, %arg14: memref<32x128xf32, #tpu.memory_space<vmem>>) attributes {dimension_semantics = [], scalar_prefetch = 0 : i64, scratch_operands = 0 : i64, tpu.core_type = #tpu.core_type<tc>} {
    %c0 = arith.constant 0 : index
    %c0_0 = arith.constant 0 : index
    %0 = vector.load %arg0[%c0, %c0_0] : memref<16x128xf32, #tpu.memory_space<vmem>>, vector<16x128xf32>
    %1 = arith.truncf %0 : vector<16x128xf32> to vector<16x128xbf16>
    %c0_1 = arith.constant 0 : index
    %c0_2 = arith.constant 0 : index
    %2 = vector.load %arg5[%c0_1, %c0_2] : memref<128x128xbf16, #tpu.memory_space<vmem>>, vector<128x128xbf16>
    %cst = arith.constant dense<0.000000e+00> : vector<16x128xf32>
    %3 = tpu.matmul %1, %2, %cst {dimension_numbers = #tpu.dot_dimension_numbers<[1], [0], [0], [1], [0, 0, 1, 1], [], []>} : vector<16x128xbf16>, vector<128x128xbf16>, vector<16x128xf32> -> vector<16x128xf32>
    %4 = arith.truncf %3 : vector<16x128xf32> to vector<16x128xbf16>
    %c0_3 = arith.constant 0 : index
    %c0_4 = arith.constant 0 : index
    %5 = vector.load %arg1[%c0_3, %c0_4] : memref<16x16xbf16, #tpu.memory_space<vmem>>, vector<16x16xbf16>
    %cst_5 = arith.constant dense<0.000000e+00> : vector<16x128xf32>
    %6 = tpu.matmul %5, %4, %cst_5 {dimension_numbers = #tpu.dot_dimension_numbers<[1], [0], [0], [1], [0, 0, 1, 1], [], []>} : vector<16x16xbf16>, vector<16x128xbf16>, vector<16x128xf32> -> vector<16x128xf32>
    %c0_6 = arith.constant 0 : index
    %c0_7 = arith.constant 0 : index
    %7 = vector.load %arg6[%c0_6, %c0_7] : memref<1x128xf32, #tpu.memory_space<vmem>>, vector<1x128xf32>
    %8 = vector.broadcast %7 : vector<1x128xf32> to vector<16x128xf32>
    %9 = arith.addf %6, %8 : vector<16x128xf32>
    %cst_8 = arith.constant 0.000000e+00 : f32
    %10 = vector.broadcast %cst_8 : f32 to vector<16x128xf32>
    %11 = arith.maximumf %9, %10 : vector<16x128xf32>
    %c0_9 = arith.constant 0 : index
    %c0_10 = arith.constant 0 : index
    %12 = vector.load %arg4[%c0_9, %c0_10] : memref<32x16xbf16, #tpu.memory_space<vmem>>, vector<32x16xbf16>
    %13 = arith.truncf %11 : vector<16x128xf32> to vector<16x128xbf16>
    %cst_11 = arith.constant dense<0.000000e+00> : vector<32x128xf32>
    %14 = tpu.matmul %12, %13, %cst_11 {dimension_numbers = #tpu.dot_dimension_numbers<[1], [0], [0], [1], [0, 0, 1, 1], [], []>} : vector<32x16xbf16>, vector<16x128xbf16>, vector<32x128xf32> -> vector<32x128xf32>
    %15 = arith.truncf %14 : vector<32x128xf32> to vector<32x128xbf16>
    %c0_12 = arith.constant 0 : index
    %c0_13 = arith.constant 0 : index
    %16 = vector.load %arg7[%c0_12, %c0_13] : memref<128x128xbf16, #tpu.memory_space<vmem>>, vector<128x128xbf16>
    %cst_14 = arith.constant dense<0.000000e+00> : vector<32x128xf32>
    %17 = tpu.matmul %15, %16, %cst_14 {dimension_numbers = #tpu.dot_dimension_numbers<[1], [0], [0], [1], [0, 0, 1, 1], [], []>} : vector<32x128xbf16>, vector<128x128xbf16>, vector<32x128xf32> -> vector<32x128xf32>
    %18 = arith.truncf %17 : vector<32x128xf32> to vector<32x128xbf16>
    %c0_15 = arith.constant 0 : index
    %c0_16 = arith.constant 0 : index
    %19 = vector.load %arg2[%c0_15, %c0_16] : memref<32x32xbf16, #tpu.memory_space<vmem>>, vector<32x32xbf16>
    %cst_17 = arith.constant dense<0.000000e+00> : vector<32x128xf32>
    %20 = tpu.matmul %19, %18, %cst_17 {dimension_numbers = #tpu.dot_dimension_numbers<[1], [0], [0], [1], [0, 0, 1, 1], [], []>} : vector<32x32xbf16>, vector<32x128xbf16>, vector<32x128xf32> -> vector<32x128xf32>
    %c0_18 = arith.constant 0 : index
    %c0_19 = arith.constant 0 : index
    %21 = vector.load %arg8[%c0_18, %c0_19] : memref<1x128xf32, #tpu.memory_space<vmem>>, vector<1x128xf32>
    %22 = vector.broadcast %21 : vector<1x128xf32> to vector<32x128xf32>
    %23 = arith.addf %20, %22 : vector<32x128xf32>
    %cst_20 = arith.constant 0.000000e+00 : f32
    %24 = vector.broadcast %cst_20 : f32 to vector<32x128xf32>
    %25 = arith.maximumf %23, %24 : vector<32x128xf32>
    %26 = arith.truncf %25 : vector<32x128xf32> to vector<32x128xbf16>
    %c0_21 = arith.constant 0 : index
    %c0_22 = arith.constant 0 : index
    %27 = vector.load %arg9[%c0_21, %c0_22] : memref<128x128xbf16, #tpu.memory_space<vmem>>, vector<128x128xbf16>
    %cst_23 = arith.constant dense<0.000000e+00> : vector<32x128xf32>
    %28 = tpu.matmul %26, %27, %cst_23 {dimension_numbers = #tpu.dot_dimension_numbers<[1], [0], [0], [1], [0, 0, 1, 1], [], []>} : vector<32x128xbf16>, vector<128x128xbf16>, vector<32x128xf32> -> vector<32x128xf32>
    %c0_24 = arith.constant 0 : index
    %c0_25 = arith.constant 0 : index
    %29 = vector.load %arg10[%c0_24, %c0_25] : memref<1x128xf32, #tpu.memory_space<vmem>>, vector<1x128xf32>
    %30 = vector.broadcast %29 : vector<1x128xf32> to vector<32x128xf32>
    %31 = arith.addf %28, %30 : vector<32x128xf32>
    %32 = arith.truncf %31 : vector<32x128xf32> to vector<32x128xbf16>
    %c0_26 = arith.constant 0 : index
    %c0_27 = arith.constant 0 : index
    %33 = vector.load %arg3[%c0_26, %c0_27] : memref<16x32xbf16, #tpu.memory_space<vmem>>, vector<16x32xbf16>
    %cst_28 = arith.constant dense<0.000000e+00> : vector<16x128xf32>
    %34 = tpu.matmul %33, %32, %cst_28 {dimension_numbers = #tpu.dot_dimension_numbers<[1], [0], [0], [1], [0, 0, 1, 1], [], []>} : vector<16x32xbf16>, vector<32x128xbf16>, vector<16x128xf32> -> vector<16x128xf32>
    %35 = arith.addf %11, %34 : vector<16x128xf32>
    %36 = arith.truncf %35 : vector<16x128xf32> to vector<16x128xbf16>
    %c0_29 = arith.constant 0 : index
    %c0_30 = arith.constant 0 : index
    %37 = vector.load %arg11[%c0_29, %c0_30] : memref<128x128xbf16, #tpu.memory_space<vmem>>, vector<128x128xbf16>
    %cst_31 = arith.constant dense<0.000000e+00> : vector<16x128xf32>
    %38 = tpu.matmul %36, %37, %cst_31 {dimension_numbers = #tpu.dot_dimension_numbers<[1], [0], [0], [1], [0, 0, 1, 1], [], []>} : vector<16x128xbf16>, vector<128x128xbf16>, vector<16x128xf32> -> vector<16x128xf32>
    %c0_32 = arith.constant 0 : index
    %c0_33 = arith.constant 0 : index
    %39 = vector.load %arg12[%c0_32, %c0_33] : memref<1x128xf32, #tpu.memory_space<vmem>>, vector<1x128xf32>
    %40 = vector.broadcast %39 : vector<1x128xf32> to vector<16x128xf32>
    %41 = arith.addf %38, %40 : vector<16x128xf32>
    %cst_34 = arith.constant 0.000000e+00 : f32
    %42 = vector.broadcast %cst_34 : f32 to vector<16x128xf32>
    %43 = arith.maximumf %41, %42 : vector<16x128xf32>
    %c0_35 = arith.constant 0 : index
    %c0_36 = arith.constant 0 : index
    %44 = vector.load %arg4[%c0_35, %c0_36] : memref<32x16xbf16, #tpu.memory_space<vmem>>, vector<32x16xbf16>
    %45 = arith.truncf %43 : vector<16x128xf32> to vector<16x128xbf16>
    %cst_37 = arith.constant dense<0.000000e+00> : vector<32x128xf32>
    %46 = tpu.matmul %44, %45, %cst_37 {dimension_numbers = #tpu.dot_dimension_numbers<[1], [0], [0], [1], [0, 0, 1, 1], [], []>} : vector<32x16xbf16>, vector<16x128xbf16>, vector<32x128xf32> -> vector<32x128xf32>
    %47 = arith.addf %25, %46 : vector<32x128xf32>
    %c0_38 = arith.constant 0 : index
    %c0_39 = arith.constant 0 : index
    %48 = vector.load %arg13[%c0_38, %c0_39] : memref<16x128xf32, #tpu.memory_space<vmem>>, vector<16x128xf32>
    tpu.vector_store %arg13[%c0_38, %c0_39], %35 {strides = array<i32>} : memref<16x128xf32, #tpu.memory_space<vmem>>, vector<16x128xf32>,
    %c0_40 = arith.constant 0 : index
    %c0_41 = arith.constant 0 : index
    %49 = vector.load %arg14[%c0_40, %c0_41] : memref<32x128xf32, #tpu.memory_space<vmem>>, vector<32x128xf32>
    tpu.vector_store %arg14[%c0_40, %c0_41], %47 {strides = array<i32>} : memref<32x128xf32, #tpu.memory_space<vmem>>, vector<32x128xf32>,
    return
  }
}

</mosaic_0001>

<llo_original>
// kernel: tpu_custom_call.1
$region0: #{tpu_custom_call.1}
  #allocation0 [shape = 'u32[]', space=smem, size = 0x4, offset = 0x4, fixed_abs, tag = 'smem constant byte address 0x4 - core index']
  #allocation1 [shape = 'u32[144,128]{1,0:T(1,128)}', space=vmem, size = 0x12000, scoped, tag = 'internal scratch']
  %s0 = inlined_call_operand.vmem [shape: f32[16,128], index: 0, kind: input, shape index: {}]
  %s1 = inlined_call_operand.vmem [shape: bf16[16,16], index: 1, kind: input, shape index: {}]
  %s2 = inlined_call_operand.hbm [shape: bf16[32,32], index: 2, kind: input, shape index: {}]
  %s3 = inlined_call_operand.hbm [shape: bf16[16,32], index: 3, kind: input, shape index: {}]
  %s4 = inlined_call_operand.vmem [shape: bf16[32,16], index: 4, kind: input, shape index: {}]
  %s5 = inlined_call_operand.hbm [shape: bf16[128,128], index: 5, kind: input, shape index: {}]
  %s6 = inlined_call_operand.vmem [shape: f32[1,128], index: 6, kind: input, shape index: {}]
  %s7 = inlined_call_operand.hbm [shape: bf16[128,128], index: 7, kind: input, shape index: {}]
  %s8 = inlined_call_operand.vmem [shape: f32[1,128], index: 8, kind: input, shape index: {}]
  %s9 = inlined_call_operand.hbm [shape: bf16[128,128], index: 9, kind: input, shape index: {}]
  %s10 = inlined_call_operand.vmem [shape: f32[1,128], index: 10, kind: input, shape index: {}]
  %s11 = inlined_call_operand.hbm [shape: bf16[128,128], index: 11, kind: input, shape index: {}]
  %s12 = inlined_call_operand.vmem [shape: f32[1,128], index: 12, kind: input, shape index: {}]
  %s13 = inlined_call_operand.hbm [shape: f32[16,128], index: 13, kind: output, shape index: {0}]
  %s14 = inlined_call_operand.hbm [shape: f32[32,128], index: 14, kind: output, shape index: {1}]
  %15 = xla_tuple %s13, %s14
  %s16 = sld [smem:[#allocation0]]
  $region94: #{tpu_custom_call.1} parent=0
    _
  %s18 = ssub.s32 1, %s16
  %s19 = scalar_select 0, %s18, %s16
  $region1: #{tpu_custom_call.1} parent=0
    #allocation2 [shape = 'u8[8192]{0}', space=vmem, size = 0x2000, scoped, tag = 'input window, operand 2, single buffered']
    #allocation3 [shape = 's32[1]{0}', space=sflag, size = 0x4, scoped, tag = 'scoped memory for tpu_custom_call.1']
    #allocation4 [shape = 's32[1]{0}', space=sflag, size = 0x4, scoped, tag = 'scoped memory for tpu_custom_call.1']
    #allocation5 [shape = 'u8[4096]{0}', space=vmem, size = 0x1000, scoped, tag = 'input window, operand 3, single buffered']
    #allocation6 [shape = 's32[1]{0}', space=sflag, size = 0x4, scoped, tag = 'scoped memory for tpu_custom_call.1']
    #allocation7 [shape = 'u8[32768]{0}', space=vmem, size = 0x8000, scoped, tag = 'input window, operand 5, single buffered']
    #allocation8 [shape = 'u8[32768]{0}', space=vmem, size = 0x8000, scoped, tag = 'input window, operand 7, single buffered']
    #allocation9 [shape = 's32[1]{0}', space=sflag, size = 0x4, scoped, tag = 'scoped memory for tpu_custom_call.1']
    #allocation10 [shape = 'u8[32768]{0}', space=vmem, size = 0x8000, scoped, tag = 'input window, operand 9, single buffered']
    #allocation11 [shape = 'u8[32768]{0}', space=vmem, size = 0x8000, scoped, tag = 'input window, operand 11, single buffered']
    #allocation12 [shape = 's32[1]{0}', space=sflag, size = 0x4, scoped, tag = 'scoped memory for tpu_custom_call.1']
    #allocation13 [shape = 'u8[8192]{0}', space=vmem, size = 0x2000, scoped, tag = 'output window, operand 0, single buffered']
    #allocation14 [shape = 'u8[16384]{0}', space=vmem, size = 0x4000, scoped, tag = 'output window, operand 1, single buffered']
    #allocation15 [shape = 's32[1]{0}', space=sflag, size = 0x4, scoped, tag = 'scoped memory for tpu_custom_call.1']
    %20 = vsyncpa [#allocation3], 0
    %21 = vsyncpa [#allocation6], 0
    %22 = vsyncpa [#allocation9], 0
    %23 = vsyncpa [#allocation12], 0
    %24 = vsyncpa [#allocation4], 0
    %25 = vsyncpa [#allocation15], 0
    // Predicated region
    $region2: #{tpu_custom_call.1} parent=1 // pred_check
      _
    $region3: #{tpu_custom_call.1} parent=1 // pred_check_branch
      %27 = sbr.rel (0) target = $region5
    $region4: #{tpu_custom_call.1} parent=1 // pred_region
      _
    $region5: #{tpu_custom_call.1} parent=1 // pred_fallthru
      _
    // Predicated region
    $region6: #{tpu_custom_call.1} parent=1 // pred_check
      _
    $region7: #{tpu_custom_call.1} parent=1 // pred_check_branch
      %29 = sbr.rel (0) target = $region9
    $region8: #{tpu_custom_call.1} parent=1 // pred_region
      _
    $region9: #{tpu_custom_call.1} parent=1 // pred_fallthru
      _
    // Predicated region
    $region10: #{tpu_custom_call.1} parent=1 // pred_check
      _
    $region11: #{tpu_custom_call.1} parent=1 // pred_check_branch
      %31 = sbr.rel (0) target = $region13
    $region12: #{tpu_custom_call.1} parent=1 // pred_region
      %s33 = ssub.s32 256, 256
      %34 = vsyncadd [#allocation3], %s33
      %s35 = sshll.u32 [#allocation2], 4
      %s36 = int_to_ptr.vmem [resolvable:$true] %s35
      %41 = dma.hbm_to_vmem [thread:$0]  %s2, 256, %s36, [#allocation3], 64, 64, 4
    $region13: #{tpu_custom_call.1} parent=1 // pred_fallthru
      _
    // Predicated region
    $region14: #{tpu_custom_call.1} parent=1 // pred_check
      _
    $region15: #{tpu_custom_call.1} parent=1 // pred_check_branch
      %43 = sbr.rel (0) target = $region17
    $region16: #{tpu_custom_call.1} parent=1 // pred_region
      %s45 = ssub.s32 128, 128
      %46 = vsyncadd [#allocation6], %s45
      %s47 = sshll.u32 [#allocation5], 4
      %s48 = int_to_ptr.vmem [resolvable:$true] %s47
      %53 = dma.hbm_to_vmem [thread:$0]  %s3, 128, %s48, [#allocation6], 64, 64, 4
    $region17: #{tpu_custom_call.1} parent=1 // pred_fallthru
      _
    // Predicated region
    $region18: #{tpu_custom_call.1} parent=1 // pred_check
      _
    $region19: #{tpu_custom_call.1} parent=1 // pred_check_branch
      %55 = sbr.rel (0) target = $region21
    $region20: #{tpu_custom_call.1} parent=1 // pred_region
      _
    $region21: #{tpu_custom_call.1} parent=1 // pred_fallthru
      _
    // Predicated region
    $region22: #{tpu_custom_call.1} parent=1 // pred_check
      _
    $region23: #{tpu_custom_call.1} parent=1 // pred_check_branch
      %57 = sbr.rel (0) target = $region25
    $region24: #{tpu_custom_call.1} parent=1 // pred_region
      %s59 = ssub.s32 1024, 1024
      %60 = vsyncadd [#allocation6], %s59
      %s61 = sshll.u32 [#allocation7], 4
      %s62 = int_to_ptr.vmem [resolvable:$true] %s61
      %67 = dma.hbm_to_vmem [thread:$0]  %s5, 1024, %s62, [#allocation6], 64, 64, 4
    $region25: #{tpu_custom_call.1} parent=1 // pred_fallthru
      _
    // Predicated region
    $region26: #{tpu_custom_call.1} parent=1 // pred_check
      _
    $region27: #{tpu_custom_call.1} parent=1 // pred_check_branch
      %69 = sbr.rel (0) target = $region29
    $region28: #{tpu_custom_call.1} parent=1 // pred_region
      _
    $region29: #{tpu_custom_call.1} parent=1 // pred_fallthru
      _
    // Predicated region
    $region30: #{tpu_custom_call.1} parent=1 // pred_check
      _
    $region31: #{tpu_custom_call.1} parent=1 // pred_check_branch
      %71 = sbr.rel (0) target = $region33
    $region32: #{tpu_custom_call.1} parent=1 // pred_region
      %s73 = ssub.s32 1024, 1024
      %74 = vsyncadd [#allocation9], %s73
      %s75 = sshll.u32 [#allocation8], 4
      %s76 = int_to_ptr.vmem [resolvable:$true] %s75
      %81 = dma.hbm_to_vmem [thread:$0]  %s7, 1024, %s76, [#allocation9], 64, 64, 4
    $region33: #{tpu_custom_call.1} parent=1 // pred_fallthru
      _
    // Predicated region
    $region34: #{tpu_custom_call.1} parent=1 // pred_check
      _
    $region35: #{tpu_custom_call.1} parent=1 // pred_check_branch
      %83 = sbr.rel (0) target = $region37
    $region36: #{tpu_custom_call.1} parent=1 // pred_region
      _
    $region37: #{tpu_custom_call.1} parent=1 // pred_fallthru
      _
    // Predicated region
    $region38: #{tpu_custom_call.1} parent=1 // pred_check
      _
    $region39: #{tpu_custom_call.1} parent=1 // pred_check_branch
      %85 = sbr.rel (0) target = $region41
    $region40: #{tpu_custom_call.1} parent=1 // pred_region
      %s87 = ssub.s32 1024, 1024
      %88 = vsyncadd [#allocation9], %s87
      %s89 = sshll.u32 [#allocation10], 4
      %s90 = int_to_ptr.vmem [resolvable:$true] %s89
      %95 = dma.hbm_to_vmem [thread:$0]  %s9, 1024, %s90, [#allocation9], 64, 64, 4
    $region41: #{tpu_custom_call.1} parent=1 // pred_fallthru
      _
    // Predicated region
    $region42: #{tpu_custom_call.1} parent=1 // pred_check
      _
    $region43: #{tpu_custom_call.1} parent=1 // pred_check_branch
      %97 = sbr.rel (0) target = $region45
    $region44: #{tpu_custom_call.1} parent=1 // pred_region
      _
    $region45: #{tpu_custom_call.1} parent=1 // pred_fallthru
      _
    // Predicated region
    $region46: #{tpu_custom_call.1} parent=1 // pred_check
      _
    $region47: #{tpu_custom_call.1} parent=1 // pred_check_branch
      %99 = sbr.rel (0) target = $region49
    $region48: #{tpu_custom_call.1} parent=1 // pred_region
      %s101 = ssub.s32 1024, 1024
      %102 = vsyncadd [#allocation12], %s101
      %s103 = sshll.u32 [#allocation11], 4
      %s104 = int_to_ptr.vmem [resolvable:$true] %s103
      %109 = dma.hbm_to_vmem [thread:$0]  %s11, 1024, %s104, [#allocation12], 64, 64, 4
    $region49: #{tpu_custom_call.1} parent=1 // pred_fallthru
      _
    // Predicated region
    $region50: #{tpu_custom_call.1} parent=1 // pred_check
      _
    $region51: #{tpu_custom_call.1} parent=1 // pred_check_branch
      %111 = sbr.rel (0) target = $region53
    $region52: #{tpu_custom_call.1} parent=1 // pred_region
      _
    $region53: #{tpu_custom_call.1} parent=1 // pred_fallthru
      _
    // Predicated region
    $region54: #{tpu_custom_call.1} parent=1 // pred_check
      _
    $region55: #{tpu_custom_call.1} parent=1 // pred_check_branch
      %113 = sbr.rel (0) target = $region57
    $region56: #{tpu_custom_call.1} parent=1 // pred_region
      %114 = dma.done [#allocation3], 256
    $region57: #{tpu_custom_call.1} parent=1 // pred_fallthru
      _
    // Predicated region
    $region58: #{tpu_custom_call.1} parent=1 // pred_check
      _
    $region59: #{tpu_custom_call.1} parent=1 // pred_check_branch
      %116 = sbr.rel (0) target = $region61
    $region60: #{tpu_custom_call.1} parent=1 // pred_region
      %117 = dma.done [#allocation6], 128
    $region61: #{tpu_custom_call.1} parent=1 // pred_fallthru
      _
    // Predicated region
    $region62: #{tpu_custom_call.1} parent=1 // pred_check
      _
    $region63: #{tpu_custom_call.1} parent=1 // pred_check_branch
      %119 = sbr.rel (0) target = $region65
    $region64: #{tpu_custom_call.1} parent=1 // pred_region
      %120 = dma.done [#allocation6], 1024
    $region65: #{tpu_custom_call.1} parent=1 // pred_fallthru
      _
    // Predicated region
    $region66: #{tpu_custom_call.1} parent=1 // pred_check
      _
    $region67: #{tpu_custom_call.1} parent=1 // pred_check_branch
      %122 = sbr.rel (0) target = $region69
    $region68: #{tpu_custom_call.1} parent=1 // pred_region
      %123 = dma.done [#allocation9], 1024
    $region69: #{tpu_custom_call.1} parent=1 // pred_fallthru
      _
    // Predicated region
    $region70: #{tpu_custom_call.1} parent=1 // pred_check
      _
    $region71: #{tpu_custom_call.1} parent=1 // pred_check_branch
      %125 = sbr.rel (0) target = $region73
    $region72: #{tpu_custom_call.1} parent=1 // pred_region
      %126 = dma.done [#allocation9], 1024
    $region73: #{tpu_custom_call.1} parent=1 // pred_fallthru
      _
    // Predicated region
    $region74: #{tpu_custom_call.1} parent=1 // pred_check
      _
    $region75: #{tpu_custom_call.1} parent=1 // pred_check_branch
      %128 = sbr.rel (0) target = $region77
    $region76: #{tpu_custom_call.1} parent=1 // pred_region
      %129 = dma.done [#allocation12], 1024
    $region77: #{tpu_custom_call.1} parent=1 // pred_fallthru
      _
    %v131 = vld [vmem:[%s0] sm:$0xff]
    %v132 = vld [vmem:[%s0 + $0x8] sm:$0xff]
    %v133 = vpack.c.bf16 %v132, %v131
    %v134 = vld [vmem:[#allocation7] sm:$0xf]
    %v135 = vld [vmem:[#allocation7 + $0x4] sm:$0xf]
    %v136 = vld [vmem:[#allocation7 + $0x8] sm:$0xf]
    %v137 = vld [vmem:[#allocation7 + $0xc] sm:$0xf]
    %v138 = vld [vmem:[#allocation7 + $0x10] sm:$0xf]
    %v139 = vld [vmem:[#allocation7 + $0x14] sm:$0xf]
    %v140 = vld [vmem:[#allocation7 + $0x18] sm:$0xf]
    %v141 = vld [vmem:[#allocation7 + $0x1c] sm:$0xf]
    %v142 = vld [vmem:[#allocation7 + $0x20] sm:$0xf]
    %v143 = vld [vmem:[#allocation7 + $0x24] sm:$0xf]
    %v144 = vld [vmem:[#allocation7 + $0x28] sm:$0xf]
    %v145 = vld [vmem:[#allocation7 + $0x2c] sm:$0xf]
    %v146 = vld [vmem:[#allocation7 + $0x30] sm:$0xf]
    %v147 = vld [vmem:[#allocation7 + $0x34] sm:$0xf]
    %v148 = vld [vmem:[#allocation7 + $0x38] sm:$0xf]
    %v149 = vld [vmem:[#allocation7 + $0x3c] sm:$0xf]
    %v166 = vunpack.c.l.b16 %v134
    %v167 = vunpack.c.l.b16 %v135
    %v168 = vunpack.c.l.b16 %v136
    %v169 = vunpack.c.l.b16 %v137
    %v170 = vunpack.c.l.b16 %v138
    %v171 = vunpack.c.l.b16 %v139
    %v172 = vunpack.c.l.b16 %v140
    %v173 = vunpack.c.l.b16 %v141
    %v174 = vunpack.c.l.b16 %v142
    %v175 = vunpack.c.l.b16 %v143
    %v176 = vunpack.c.l.b16 %v144
    %v177 = vunpack.c.l.b16 %v145
    %v178 = vunpack.c.l.b16 %v146
    %v179 = vunpack.c.l.b16 %v147
    %v180 = vunpack.c.l.b16 %v148
    %v181 = vunpack.c.l.b16 %v149
    %v182 = vpack.c.b16 %v167, %v166
    %v183 = vpack.c.b16 %v169, %v168
    %v184 = vpack.c.b16 %v171, %v170
    %v185 = vpack.c.b16 %v173, %v172
    %v186 = vpack.c.b16 %v175, %v174
    %v187 = vpack.c.b16 %v177, %v176
    %v188 = vpack.c.b16 %v179, %v178
    %v189 = vpack.c.b16 %v181, %v180
    %198 = vmatprep.subr.bf16.mxu0 0
    %199 = vmatpush1.bf16.msra.mxu0 %v189
    %200 = vmatprep.subr.bf16.mxu0 0
    %201 = vmatpush1.bf16.msra.mxu0 %v188
    %202 = vmatprep.subr.bf16.mxu0 0
    %203 = vmatpush1.bf16.msra.mxu0 %v187
    %204 = vmatprep.subr.bf16.mxu0 0
    %205 = vmatpush1.bf16.msra.mxu0 %v186
    %206 = vmatprep.subr.bf16.mxu0 0
    %207 = vmatpush1.bf16.msra.mxu0 %v185
    %208 = vmatprep.subr.bf16.mxu0 0
    %209 = vmatpush1.bf16.msra.mxu0 %v184
    %210 = vmatprep.subr.bf16.mxu0 0
    %211 = vmatpush1.bf16.msra.mxu0 %v183
    %212 = vmatprep.subr.bf16.mxu0 0
    %213 = vmatpush1.bf16.msra.mxu0 %v182
    %214 = vmatprep.subr.bf16.mxu0 0
    %215 = vmatpush2.bf16.msra.mxu0 0
    %216 = vmatprep.subr.bf16.mxu0 0
    %217 = vmatpush2.bf16.msra.mxu0 0
    %218 = vmatprep.subr.bf16.mxu0 0
    %219 = vmatpush2.bf16.msra.mxu0 0
    %220 = vmatprep.subr.bf16.mxu0 0
    %221 = vmatpush2.bf16.msra.mxu0 0
    %222 = vmatprep.subr.bf16.mxu0 0
    %223 = vmatpush2.bf16.msra.mxu0 0
    %224 = vmatprep.subr.bf16.mxu0 0
    %225 = vmatpush2.bf16.msra.mxu0 0
    %226 = vmatprep.subr.bf16.mxu0 0
    %227 = vmatpush2.bf16.msra.mxu0 0
    %228 = vmatprep.subr.bf16.mxu0 0
    %229 = vmatpush2.bf16.msra.mxu0 0
    %230 = vmatprep.mubr.bf16.mxu0 0
    %231 = vmatmul.mubr.bf16.gmra.mxu0 %v133
    %v232 = vpop.f32.mrf.mxu0
    %v233 = vadd.f32 0.0, %v232
    %v234 = vpop.f32.mrf.mxu0
    %v235 = vpop.f32.mrf.mxu0
    %v236 = vadd.f32 0.0, %v235
    %v237 = vpop.f32.mrf.mxu0
    %238 = vdwg.mxu0
    %v239 = vpack.c.bf16 %v236, %v233
    %v240 = vld [vmem:[%s1] sm:$0xf]
    %v241 = vld [vmem:[%s1 + $0x4] sm:$0xf]
    %v242 = vld [vmem:[%s6] sm:$0x1]
    %v244 = vlaneseq
    %v245 = vshrl.u32 %v244, 7
    %v246 = vsub.s32 0, %v245
    %v247 = vrot.slane %v242, %v246
    %v251 = vunpack.c.l.b16 %v240
    %v252 = vunpack.c.l.b16 %v241
    %v253 = vpack.c.b16 %v252, %v251
    %vm254 = vcmask 130048
    %v256 = vsel %vm254, %v253, 0
    %258 = vmatprep.subr.bf16.mxu0 0
    %259 = vmatpush1.bf16.msra.mxu0 0
    %260 = vmatprep.subr.bf16.mxu0 0
    %261 = vmatpush1.bf16.msra.mxu0 0
    %262 = vmatprep.subr.bf16.mxu0 0
    %263 = vmatpush1.bf16.msra.mxu0 0
    %264 = vmatprep.subr.bf16.mxu0 0
    %265 = vmatpush1.bf16.msra.mxu0 0
    %266 = vmatprep.subr.bf16.mxu0 0
    %267 = vmatpush1.bf16.msra.mxu0 0
    %268 = vmatprep.subr.bf16.mxu0 0
    %269 = vmatpush1.bf16.msra.mxu0 0
    %270 = vmatprep.subr.bf16.mxu0 0
    %271 = vmatpush1.bf16.msra.mxu0 0
    %272 = vmatprep.subr.bf16.mxu0 0
    %273 = vmatpush1.bf16.msra.mxu0 %v239
    %274 = vmatprep.subr.bf16.mxu0 0
    %275 = vmatpush2.bf16.msra.mxu0 0
    %276 = vmatprep.subr.bf16.mxu0 0
    %277 = vmatpush2.bf16.msra.mxu0 0
    %278 = vmatprep.subr.bf16.mxu0 0
    %279 = vmatpush2.bf16.msra.mxu0 0
    %280 = vmatprep.subr.bf16.mxu0 0
    %281 = vmatpush2.bf16.msra.mxu0 0
    %282 = vmatprep.subr.bf16.mxu0 0
    %283 = vmatpush2.bf16.msra.mxu0 0
    %284 = vmatprep.subr.bf16.mxu0 0
    %285 = vmatpush2.bf16.msra.mxu0 0
    %286 = vmatprep.subr.bf16.mxu0 0
    %287 = vmatpush2.bf16.msra.mxu0 0
    %288 = vmatprep.subr.bf16.mxu0 0
    %289 = vmatpush2.bf16.msra.mxu0 0
    %290 = vmatprep.mubr.bf16.mxu0 0
    %291 = vmatmul.mubr.bf16.gmra.mxu0 %v256
    %v292 = vpop.f32.mrf.mxu0
    %v293 = vadd.f32 %v247, %v292
    %v294 = vpop.f32.mrf.mxu0
    %v295 = vpop.f32.mrf.mxu0
    %v296 = vadd.f32 %v247, %v295
    %v297 = vpop.f32.mrf.mxu0
    %298 = vdwg.mxu0
    %v299 = vmax.f32 %v293, 0.0
    %v300 = vmax.f32 %v296, 0.0
    %v301 = vld [vmem:[%s4] sm:$0xf]
    %v302 = vld [vmem:[%s4 + $0x4] sm:$0xf]
    %v303 = vld [vmem:[%s4 + $0x8] sm:$0xf]
    %v304 = vld [vmem:[%s4 + $0xc] sm:$0xf]
    %v305 = vpack.c.bf16 %v300, %v299
    %v310 = vunpack.c.l.b16 %v301
    %v311 = vunpack.c.l.b16 %v302
    %v312 = vunpack.c.l.b16 %v303
    %v313 = vunpack.c.l.b16 %v304
    %v314 = vpack.c.b16 %v311, %v310
    %v315 = vpack.c.b16 %v313, %v312
    %v317 = vsel %vm254, %v314, 0
    %v320 = vsel %vm254, %v315, 0
    %322 = vmatprep.subr.bf16.mxu0 0
    %323 = vmatpush1.bf16.msra.mxu0 0
    %324 = vmatprep.subr.bf16.mxu0 0
    %325 = vmatpush1.bf16.msra.mxu0 0
    %326 = vmatprep.subr.bf16.mxu0 0
    %327 = vmatpush1.bf16.msra.mxu0 0
    %328 = vmatprep.subr.bf16.mxu0 0
    %329 = vmatpush1.bf16.msra.mxu0 0
    %330 = vmatprep.subr.bf16.mxu0 0
    %331 = vmatpush1.bf16.msra.mxu0 0
    %332 = vmatprep.subr.bf16.mxu0 0
    %333 = vmatpush1.bf16.msra.mxu0 0
    %334 = vmatprep.subr.bf16.mxu0 0
    %335 = vmatpush1.bf16.msra.mxu0 0
    %336 = vmatprep.subr.bf16.mxu0 0
    %337 = vmatpush1.bf16.msra.mxu0 %v305
    %338 = vmatprep.subr.bf16.mxu0 0
    %339 = vmatpush2.bf16.msra.mxu0 0
    %340 = vmatprep.subr.bf16.mxu0 0
    %341 = vmatpush2.bf16.msra.mxu0 0
    %342 = vmatprep.subr.bf16.mxu0 0
    %343 = vmatpush2.bf16.msra.mxu0 0
    %344 = vmatprep.subr.bf16.mxu0 0
    %345 = vmatpush2.bf16.msra.mxu0 0
    %346 = vmatprep.subr.bf16.mxu0 0
    %347 = vmatpush2.bf16.msra.mxu0 0
    %348 = vmatprep.subr.bf16.mxu0 0
    %349 = vmatpush2.bf16.msra.mxu0 0
    %350 = vmatprep.subr.bf16.mxu0 0
    %351 = vmatpush2.bf16.msra.mxu0 0
    %352 = vmatprep.subr.bf16.mxu0 0
    %353 = vmatpush2.bf16.msra.mxu0 0
    %354 = vmatprep.mubr.bf16.mxu0 0
    %355 = vmatmul.mubr.bf16.gmra.mxu0 %v317
    %v356 = vpop.f32.mrf.mxu0
    %v357 = vadd.f32 0.0, %v356
    %v358 = vpop.f32.mrf.mxu0
    %v359 = vpop.f32.mrf.mxu0
    %v360 = vadd.f32 0.0, %v359
    %v361 = vpop.f32.mrf.mxu0
    %362 = vmatprep.mubr.bf16.mxu0 0
    %363 = vmatmul.mubr.bf16.gmra.mxu0 %v320
    %v364 = vpop.f32.mrf.mxu0
    %v365 = vadd.f32 0.0, %v364
    %v366 = vpop.f32.mrf.mxu0
    %v367 = vpop.f32.mrf.mxu0
    %v368 = vadd.f32 0.0, %v367
    %v369 = vpop.f32.mrf.mxu0
    %370 = vdwg.mxu0
    %v371 = vpack.c.bf16 %v360, %v357
    %v372 = vpack.c.bf16 %v368, %v365
    %v373 = vld [vmem:[#allocation8] sm:$0xf]
    %v374 = vld [vmem:[#allocation8 + $0x4] sm:$0xf]
    %v375 = vld [vmem:[#allocation8 + $0x8] sm:$0xf]
    %v376 = vld [vmem:[#allocation8 + $0xc] sm:$0xf]
    %v377 = vld [vmem:[#allocation8 + $0x10] sm:$0xf]
    %v378 = vld [vmem:[#allocation8 + $0x14] sm:$0xf]
    %v379 = vld [vmem:[#allocation8 + $0x18] sm:$0xf]
    %v380 = vld [vmem:[#allocation8 + $0x1c] sm:$0xf]
    %v381 = vld [vmem:[#allocation8 + $0x20] sm:$0xf]
    %v382 = vld [vmem:[#allocation8 + $0x24] sm:$0xf]
    %v383 = vld [vmem:[#allocation8 + $0x28] sm:$0xf]
    %v384 = vld [vmem:[#allocation8 + $0x2c] sm:$0xf]
    %v385 = vld [vmem:[#allocation8 + $0x30] sm:$0xf]
    %v386 = vld [vmem:[#allocation8 + $0x34] sm:$0xf]
    %v387 = vld [vmem:[#allocation8 + $0x38] sm:$0xf]
    %v388 = vld [vmem:[#allocation8 + $0x3c] sm:$0xf]
    %v405 = vunpack.c.l.b16 %v373
    %v406 = vunpack.c.l.b16 %v374
    %v407 = vunpack.c.l.b16 %v375
    %v408 = vunpack.c.l.b16 %v376
    %v409 = vunpack.c.l.b16 %v377
    %v410 = vunpack.c.l.b16 %v378
    %v411 = vunpack.c.l.b16 %v379
    %v412 = vunpack.c.l.b16 %v380
    %v413 = vunpack.c.l.b16 %v381
    %v414 = vunpack.c.l.b16 %v382
    %v415 = vunpack.c.l.b16 %v383
    %v416 = vunpack.c.l.b16 %v384
    %v417 = vunpack.c.l.b16 %v385
    %v418 = vunpack.c.l.b16 %v386
    %v419 = vunpack.c.l.b16 %v387
    %v420 = vunpack.c.l.b16 %v388
    %v421 = vpack.c.b16 %v406, %v405
    %v422 = vpack.c.b16 %v408, %v407
    %v423 = vpack.c.b16 %v410, %v409
    %v424 = vpack.c.b16 %v412, %v411
    %v425 = vpack.c.b16 %v414, %v413
    %v426 = vpack.c.b16 %v416, %v415
    %v427 = vpack.c.b16 %v418, %v417
    %v428 = vpack.c.b16 %v420, %v419
    %437 = vmatprep.subr.bf16.mxu0 0
    %438 = vmatpush1.bf16.msra.mxu0 %v428
    %439 = vmatprep.subr.bf16.mxu0 0
    %440 = vmatpush1.bf16.msra.mxu0 %v427
    %441 = vmatprep.subr.bf16.mxu0 0
    %442 = vmatpush1.bf16.msra.mxu0 %v426
    %443 = vmatprep.subr.bf16.mxu0 0
    %444 = vmatpush1.bf16.msra.mxu0 %v425
    %445 = vmatprep.subr.bf16.mxu0 0
    %446 = vmatpush1.bf16.msra.mxu0 %v424
    %447 = vmatprep.subr.bf16.mxu0 0
    %448 = vmatpush1.bf16.msra.mxu0 %v423
    %449 = vmatprep.subr.bf16.mxu0 0
    %450 = vmatpush1.bf16.msra.mxu0 %v422
    %451 = vmatprep.subr.bf16.mxu0 0
    %452 = vmatpush1.bf16.msra.mxu0 %v421
    %453 = vmatprep.subr.bf16.mxu0 0
    %454 = vmatpush2.bf16.msra.mxu0 0
    %455 = vmatprep.subr.bf16.mxu0 0
    %456 = vmatpush2.bf16.msra.mxu0 0
    %457 = vmatprep.subr.bf16.mxu0 0
    %458 = vmatpush2.bf16.msra.mxu0 0
    %459 = vmatprep.subr.bf16.mxu0 0
    %460 = vmatpush2.bf16.msra.mxu0 0
    %461 = vmatprep.subr.bf16.mxu0 0
    %462 = vmatpush2.bf16.msra.mxu0 0
    %463 = vmatprep.subr.bf16.mxu0 0
    %464 = vmatpush2.bf16.msra.mxu0 0
    %465 = vmatprep.subr.bf16.mxu0 0
    %466 = vmatpush2.bf16.msra.mxu0 0
    %467 = vmatprep.subr.bf16.mxu0 0
    %468 = vmatpush2.bf16.msra.mxu0 0
    %469 = vmatprep.mubr.bf16.mxu0 0
    %470 = vmatmul.mubr.bf16.gmra.mxu0 %v371
    %v471 = vpop.f32.mrf.mxu0
    %v472 = vadd.f32 0.0, %v471
    %v473 = vpop.f32.mrf.mxu0
    %v474 = vpop.f32.mrf.mxu0
    %v475 = vadd.f32 0.0, %v474
    %v476 = vpop.f32.mrf.mxu0
    %477 = vmatprep.mubr.bf16.mxu0 0
    %478 = vmatmul.mubr.bf16.gmra.mxu0 %v372
    %v479 = vpop.f32.mrf.mxu0
    %v480 = vadd.f32 0.0, %v479
    %v481 = vpop.f32.mrf.mxu0
    %v482 = vpop.f32.mrf.mxu0
    %v483 = vadd.f32 0.0, %v482
    %v484 = vpop.f32.mrf.mxu0
    %485 = vdwg.mxu0
    %v486 = vpack.c.bf16 %v475, %v472
    %v487 = vpack.c.bf16 %v483, %v480
    %v488 = vld [vmem:[#allocation2] sm:$0xf]
    %v489 = vld [vmem:[#allocation2 + $0x4] sm:$0xf]
    %v490 = vld [vmem:[#allocation2 + $0x8] sm:$0xf]
    %v491 = vld [vmem:[#allocation2 + $0xc] sm:$0xf]
    %v492 = vld [vmem:[%s8] sm:$0x1]
    %v494 = vlaneseq
    %v495 = vshrl.u32 %v494, 7
    %v496 = vsub.s32 0, %v495
    %v497 = vrot.slane %v492, %v496
    %v503 = vunpack.c.l.b16 %v488
    %v504 = vunpack.c.l.b16 %v489
    %v505 = vunpack.c.l.b16 %v490
    %v506 = vunpack.c.l.b16 %v491
    %v507 = vpack.c.b16 %v504, %v503
    %v508 = vpack.c.b16 %v506, %v505
    %vm509 = vcmask 261120
    %v511 = vsel %vm509, %v507, 0
    %v514 = vsel %vm509, %v508, 0
    %516 = vmatprep.subr.bf16.mxu0 0
    %517 = vmatpush1.bf16.msra.mxu0 0
    %518 = vmatprep.subr.bf16.mxu0 0
    %519 = vmatpush1.bf16.msra.mxu0 0
    %520 = vmatprep.subr.bf16.mxu0 0
    %521 = vmatpush1.bf16.msra.mxu0 0
    %522 = vmatprep.subr.bf16.mxu0 0
    %523 = vmatpush1.bf16.msra.mxu0 0
    %524 = vmatprep.subr.bf16.mxu0 0
    %525 = vmatpush1.bf16.msra.mxu0 0
    %526 = vmatprep.subr.bf16.mxu0 0
    %527 = vmatpush1.bf16.msra.mxu0 0
    %528 = vmatprep.subr.bf16.mxu0 0
    %529 = vmatpush1.bf16.msra.mxu0 %v487
    %530 = vmatprep.subr.bf16.mxu0 0
    %531 = vmatpush1.bf16.msra.mxu0 %v486
    %532 = vmatprep.subr.bf16.mxu0 0
    %533 = vmatpush2.bf16.msra.mxu0 0
    %534 = vmatprep.subr.bf16.mxu0 0
    %535 = vmatpush2.bf16.msra.mxu0 0
    %536 = vmatprep.subr.bf16.mxu0 0
    %537 = vmatpush2.bf16.msra.mxu0 0
    %538 = vmatprep.subr.bf16.mxu0 0
    %539 = vmatpush2.bf16.msra.mxu0 0
    %540 = vmatprep.subr.bf16.mxu0 0
    %541 = vmatpush2.bf16.msra.mxu0 0
    %542 = vmatprep.subr.bf16.mxu0 0
    %543 = vmatpush2.bf16.msra.mxu0 0
    %544 = vmatprep.subr.bf16.mxu0 0
    %545 = vmatpush2.bf16.msra.mxu0 0
    %546 = vmatprep.subr.bf16.mxu0 0
    %547 = vmatpush2.bf16.msra.mxu0 0
    %548 = vmatprep.mubr.bf16.mxu0 0
    %549 = vmatmul.mubr.bf16.gmra.mxu0 %v511
    %v550 = vpop.f32.mrf.mxu0
    %v551 = vadd.f32 %v497, %v550
    %v552 = vpop.f32.mrf.mxu0
    %v553 = vpop.f32.mrf.mxu0
    %v554 = vadd.f32 %v497, %v553
    %v555 = vpop.f32.mrf.mxu0
    %556 = vmatprep.mubr.bf16.mxu0 0
    %557 = vmatmul.mubr.bf16.gmra.mxu0 %v514
    %v558 = vpop.f32.mrf.mxu0
    %v559 = vadd.f32 %v497, %v558
    %v560 = vpop.f32.mrf.mxu0
    %v561 = vpop.f32.mrf.mxu0
    %v562 = vadd.f32 %v497, %v561
    %v563 = vpop.f32.mrf.mxu0
    %564 = vdwg.mxu0
    %v565 = vmax.f32 %v551, 0.0
    %v566 = vmax.f32 %v554, 0.0
    %v567 = vmax.f32 %v559, 0.0
    %v568 = vmax.f32 %v562, 0.0
    %v569 = vpack.c.bf16 %v566, %v565
    %v570 = vpack.c.bf16 %v568, %v567
    %v571 = vld [vmem:[#allocation10] sm:$0xf]
    %v572 = vld [vmem:[#allocation10 + $0x4] sm:$0xf]
    %v573 = vld [vmem:[#allocation10 + $0x8] sm:$0xf]
    %v574 = vld [vmem:[#allocation10 + $0xc] sm:$0xf]
    %v575 = vld [vmem:[#allocation10 + $0x10] sm:$0xf]
    %v576 = vld [vmem:[#allocation10 + $0x14] sm:$0xf]
    %v577 = vld [vmem:[#allocation10 + $0x18] sm:$0xf]
    %v578 = vld [vmem:[#allocation10 + $0x1c] sm:$0xf]
    %v579 = vld [vmem:[#allocation10 + $0x20] sm:$0xf]
    %v580 = vld [vmem:[#allocation10 + $0x24] sm:$0xf]
    %v581 = vld [vmem:[#allocation10 + $0x28] sm:$0xf]
    %v582 = vld [vmem:[#allocation10 + $0x2c] sm:$0xf]
    %v583 = vld [vmem:[#allocation10 + $0x30] sm:$0xf]
    %v584 = vld [vmem:[#allocation10 + $0x34] sm:$0xf]
    %v585 = vld [vmem:[#allocation10 + $0x38] sm:$0xf]
    %v586 = vld [vmem:[#allocation10 + $0x3c] sm:$0xf]
    %v587 = vld [vmem:[%s10] sm:$0x1]
    %v589 = vlaneseq
    %v590 = vshrl.u32 %v589, 7
    %v591 = vsub.s32 0, %v590
    %v592 = vrot.slane %v587, %v591
    %v610 = vunpack.c.l.b16 %v571
    %v611 = vunpack.c.l.b16 %v572
    %v612 = vunpack.c.l.b16 %v573
    %v613 = vunpack.c.l.b16 %v574
    %v614 = vunpack.c.l.b16 %v575
    %v615 = vunpack.c.l.b16 %v576
    %v616 = vunpack.c.l.b16 %v577
    %v617 = vunpack.c.l.b16 %v578
    %v618 = vunpack.c.l.b16 %v579
    %v619 = vunpack.c.l.b16 %v580
    %v620 = vunpack.c.l.b16 %v581
    %v621 = vunpack.c.l.b16 %v582
    %v622 = vunpack.c.l.b16 %v583
    %v623 = vunpack.c.l.b16 %v584
    %v624 = vunpack.c.l.b16 %v585
    %v625 = vunpack.c.l.b16 %v586
    %v626 = vpack.c.b16 %v611, %v610
    %v627 = vpack.c.b16 %v613, %v612
    %v628 = vpack.c.b16 %v615, %v614
    %v629 = vpack.c.b16 %v617, %v616
    %v630 = vpack.c.b16 %v619, %v618
    %v631 = vpack.c.b16 %v621, %v620
    %v632 = vpack.c.b16 %v623, %v622
    %v633 = vpack.c.b16 %v625, %v624
    %642 = vmatprep.subr.bf16.mxu0 0
    %643 = vmatpush1.bf16.msra.mxu0 %v633
    %644 = vmatprep.subr.bf16.mxu0 0
    %645 = vmatpush1.bf16.msra.mxu0 %v632
    %646 = vmatprep.subr.bf16.mxu0 0
    %647 = vmatpush1.bf16.msra.mxu0 %v631
    %648 = vmatprep.subr.bf16.mxu0 0
    %649 = vmatpush1.bf16.msra.mxu0 %v630
    %650 = vmatprep.subr.bf16.mxu0 0
    %651 = vmatpush1.bf16.msra.mxu0 %v629
    %652 = vmatprep.subr.bf16.mxu0 0
    %653 = vmatpush1.bf16.msra.mxu0 %v628
    %654 = vmatprep.subr.bf16.mxu0 0
    %655 = vmatpush1.bf16.msra.mxu0 %v627
    %656 = vmatprep.subr.bf16.mxu0 0
    %657 = vmatpush1.bf16.msra.mxu0 %v626
    %658 = vmatprep.subr.bf16.mxu0 0
    %659 = vmatpush2.bf16.msra.mxu0 0
    %660 = vmatprep.subr.bf16.mxu0 0
    %661 = vmatpush2.bf16.msra.mxu0 0
    %662 = vmatprep.subr.bf16.mxu0 0
    %663 = vmatpush2.bf16.msra.mxu0 0
    %664 = vmatprep.subr.bf16.mxu0 0
    %665 = vmatpush2.bf16.msra.mxu0 0
    %666 = vmatprep.subr.bf16.mxu0 0
    %667 = vmatpush2.bf16.msra.mxu0 0
    %668 = vmatprep.subr.bf16.mxu0 0
    %669 = vmatpush2.bf16.msra.mxu0 0
    %670 = vmatprep.subr.bf16.mxu0 0
    %671 = vmatpush2.bf16.msra.mxu0 0
    %672 = vmatprep.subr.bf16.mxu0 0
    %673 = vmatpush2.bf16.msra.mxu0 0
    %674 = vmatprep.mubr.bf16.mxu0 0
    %675 = vmatmul.mubr.bf16.gmra.mxu0 %v569
    %v676 = vpop.f32.mrf.mxu0
    %v677 = vadd.f32 %v592, %v676
    %v678 = vpop.f32.mrf.mxu0
    %v679 = vpop.f32.mrf.mxu0
    %v680 = vadd.f32 %v592, %v679
    %v681 = vpop.f32.mrf.mxu0
    %682 = vmatprep.mubr.bf16.mxu0 0
    %683 = vmatmul.mubr.bf16.gmra.mxu0 %v570
    %v684 = vpop.f32.mrf.mxu0
    %v685 = vadd.f32 %v592, %v684
    %v686 = vpop.f32.mrf.mxu0
    %v687 = vpop.f32.mrf.mxu0
    %v688 = vadd.f32 %v592, %v687
    %v689 = vpop.f32.mrf.mxu0
    %690 = vdwg.mxu0
    %v691 = vpack.c.bf16 %v680, %v677
    %v692 = vpack.c.bf16 %v688, %v685
    %v693 = vld [vmem:[#allocation5] sm:$0xf]
    %v694 = vld [vmem:[#allocation5 + $0x4] sm:$0xf]
    %v697 = vunpack.c.l.b16 %v693
    %v698 = vunpack.c.l.b16 %v694
    %v699 = vpack.c.b16 %v698, %v697
    %v701 = vsel %vm509, %v699, 0
    %703 = vmatprep.subr.bf16.mxu0 0
    %704 = vmatpush1.bf16.msra.mxu0 0
    %705 = vmatprep.subr.bf16.mxu0 0
    %706 = vmatpush1.bf16.msra.mxu0 0
    %707 = vmatprep.subr.bf16.mxu0 0
    %708 = vmatpush1.bf16.msra.mxu0 0
    %709 = vmatprep.subr.bf16.mxu0 0
    %710 = vmatpush1.bf16.msra.mxu0 0
    %711 = vmatprep.subr.bf16.mxu0 0
    %712 = vmatpush1.bf16.msra.mxu0 0
    %713 = vmatprep.subr.bf16.mxu0 0
    %714 = vmatpush1.bf16.msra.mxu0 0
    %715 = vmatprep.subr.bf16.mxu0 0
    %716 = vmatpush1.bf16.msra.mxu0 %v692
    %717 = vmatprep.subr.bf16.mxu0 0
    %718 = vmatpush1.bf16.msra.mxu0 %v691
    %719 = vmatprep.subr.bf16.mxu0 0
    %720 = vmatpush2.bf16.msra.mxu0 0
    %721 = vmatprep.subr.bf16.mxu0 0
    %722 = vmatpush2.bf16.msra.mxu0 0
    %723 = vmatprep.subr.bf16.mxu0 0
    %724 = vmatpush2.bf16.msra.mxu0 0
    %725 = vmatprep.subr.bf16.mxu0 0
    %726 = vmatpush2.bf16.msra.mxu0 0
    %727 = vmatprep.subr.bf16.mxu0 0
    %728 = vmatpush2.bf16.msra.mxu0 0
    %729 = vmatprep.subr.bf16.mxu0 0
    %730 = vmatpush2.bf16.msra.mxu0 0
    %731 = vmatprep.subr.bf16.mxu0 0
    %732 = vmatpush2.bf16.msra.mxu0 0
    %733 = vmatprep.subr.bf16.mxu0 0
    %734 = vmatpush2.bf16.msra.mxu0 0
    %735 = vmatprep.mubr.bf16.mxu0 0
    %736 = vmatmul.mubr.bf16.gmra.mxu0 %v701
    %v737 = vpop.f32.mrf.mxu0
    %v738 = vadd.f32 0.0, %v737
    %v739 = vpop.f32.mrf.mxu0
    %v740 = vpop.f32.mrf.mxu0
    %v741 = vadd.f32 0.0, %v740
    %v742 = vpop.f32.mrf.mxu0
    %743 = vdwg.mxu0
    %v744 = vadd.f32 %v299, %v738
    %v745 = vadd.f32 %v300, %v741
    %v746 = vpack.c.bf16 %v745, %v744
    %v747 = vld [vmem:[#allocation11] sm:$0xf]
    %v748 = vld [vmem:[#allocation11 + $0x4] sm:$0xf]
    %v749 = vld [vmem:[#allocation11 + $0x8] sm:$0xf]
    %v750 = vld [vmem:[#allocation11 + $0xc] sm:$0xf]
    %v751 = vld [vmem:[#allocation11 + $0x10] sm:$0xf]
    %v752 = vld [vmem:[#allocation11 + $0x14] sm:$0xf]
    %v753 = vld [vmem:[#allocation11 + $0x18] sm:$0xf]
    %v754 = vld [vmem:[#allocation11 + $0x1c] sm:$0xf]
    %v755 = vld [vmem:[#allocation11 + $0x20] sm:$0xf]
    %v756 = vld [vmem:[#allocation11 + $0x24] sm:$0xf]
    %v757 = vld [vmem:[#allocation11 + $0x28] sm:$0xf]
    %v758 = vld [vmem:[#allocation11 + $0x2c] sm:$0xf]
    %v759 = vld [vmem:[#allocation11 + $0x30] sm:$0xf]
    %v760 = vld [vmem:[#allocation11 + $0x34] sm:$0xf]
    %v761 = vld [vmem:[#allocation11 + $0x38] sm:$0xf]
    %v762 = vld [vmem:[#allocation11 + $0x3c] sm:$0xf]
    %v763 = vld [vmem:[%s12] sm:$0x1]
    %v765 = vlaneseq
    %v766 = vshrl.u32 %v765, 7
    %v767 = vsub.s32 0, %v766
    %v768 = vrot.slane %v763, %v767
    %v786 = vunpack.c.l.b16 %v747
    %v787 = vunpack.c.l.b16 %v748
    %v788 = vunpack.c.l.b16 %v749
    %v789 = vunpack.c.l.b16 %v750
    %v790 = vunpack.c.l.b16 %v751
    %v791 = vunpack.c.l.b16 %v752
    %v792 = vunpack.c.l.b16 %v753
    %v793 = vunpack.c.l.b16 %v754
    %v794 = vunpack.c.l.b16 %v755
    %v795 = vunpack.c.l.b16 %v756
    %v796 = vunpack.c.l.b16 %v757
    %v797 = vunpack.c.l.b16 %v758
    %v798 = vunpack.c.l.b16 %v759
    %v799 = vunpack.c.l.b16 %v760
    %v800 = vunpack.c.l.b16 %v761
    %v801 = vunpack.c.l.b16 %v762
    %v802 = vpack.c.b16 %v787, %v786
    %v803 = vpack.c.b16 %v789, %v788
    %v804 = vpack.c.b16 %v791, %v790
    %v805 = vpack.c.b16 %v793, %v792
    %v806 = vpack.c.b16 %v795, %v794
    %v807 = vpack.c.b16 %v797, %v796
    %v808 = vpack.c.b16 %v799, %v798
    %v809 = vpack.c.b16 %v801, %v800
    %818 = vmatprep.subr.bf16.mxu0 0
    %819 = vmatpush1.bf16.msra.mxu0 %v809
    %820 = vmatprep.subr.bf16.mxu0 0
    %821 = vmatpush1.bf16.msra.mxu0 %v808
    %822 = vmatprep.subr.bf16.mxu0 0
    %823 = vmatpush1.bf16.msra.mxu0 %v807
    %824 = vmatprep.subr.bf16.mxu0 0
    %825 = vmatpush1.bf16.msra.mxu0 %v806
    %826 = vmatprep.subr.bf16.mxu0 0
    %827 = vmatpush1.bf16.msra.mxu0 %v805
    %828 = vmatprep.subr.bf16.mxu0 0
    %829 = vmatpush1.bf16.msra.mxu0 %v804
    %830 = vmatprep.subr.bf16.mxu0 0
    %831 = vmatpush1.bf16.msra.mxu0 %v803
    %832 = vmatprep.subr.bf16.mxu0 0
    %833 = vmatpush1.bf16.msra.mxu0 %v802
    %834 = vmatprep.subr.bf16.mxu0 0
    %835 = vmatpush2.bf16.msra.mxu0 0
    %836 = vmatprep.subr.bf16.mxu0 0
    %837 = vmatpush2.bf16.msra.mxu0 0
    %838 = vmatprep.subr.bf16.mxu0 0
    %839 = vmatpush2.bf16.msra.mxu0 0
    %840 = vmatprep.subr.bf16.mxu0 0
    %841 = vmatpush2.bf16.msra.mxu0 0
    %842 = vmatprep.subr.bf16.mxu0 0
    %843 = vmatpush2.bf16.msra.mxu0 0
    %844 = vmatprep.subr.bf16.mxu0 0
    %845 = vmatpush2.bf16.msra.mxu0 0
    %846 = vmatprep.subr.bf16.mxu0 0
    %847 = vmatpush2.bf16.msra.mxu0 0
    %848 = vmatprep.subr.bf16.mxu0 0
    %849 = vmatpush2.bf16.msra.mxu0 0
    %850 = vmatprep.mubr.bf16.mxu0 0
    %851 = vmatmul.mubr.bf16.gmra.mxu0 %v746
    %v852 = vpop.f32.mrf.mxu0
    %v853 = vadd.f32 %v768, %v852
    %v854 = vpop.f32.mrf.mxu0
    %v855 = vpop.f32.mrf.mxu0
    %v856 = vadd.f32 %v768, %v855
    %v857 = vpop.f32.mrf.mxu0
    %858 = vdwg.mxu0
    %v859 = vmax.f32 %v853, 0.0
    %v860 = vmax.f32 %v856, 0.0
    %v861 = vpack.c.bf16 %v860, %v859
    %862 = vmatprep.subr.bf16.mxu0 0
    %863 = vmatpush1.bf16.msra.mxu0 0
    %864 = vmatprep.subr.bf16.mxu0 0
    %865 = vmatpush1.bf16.msra.mxu0 0
    %866 = vmatprep.subr.bf16.mxu0 0
    %867 = vmatpush1.bf16.msra.mxu0 0
    %868 = vmatprep.subr.bf16.mxu0 0
    %869 = vmatpush1.bf16.msra.mxu0 0
    %870 = vmatprep.subr.bf16.mxu0 0
    %871 = vmatpush1.bf16.msra.mxu0 0
    %872 = vmatprep.subr.bf16.mxu0 0
    %873 = vmatpush1.bf16.msra.mxu0 0
    %874 = vmatprep.subr.bf16.mxu0 0
    %875 = vmatpush1.bf16.msra.mxu0 0
    %876 = vmatprep.subr.bf16.mxu0 0
    %877 = vmatpush1.bf16.msra.mxu0 %v861
    %878 = vmatprep.subr.bf16.mxu0 0
    %879 = vmatpush2.bf16.msra.mxu0 0
    %880 = vmatprep.subr.bf16.mxu0 0
    %881 = vmatpush2.bf16.msra.mxu0 0
    %882 = vmatprep.subr.bf16.mxu0 0
    %883 = vmatpush2.bf16.msra.mxu0 0
    %884 = vmatprep.subr.bf16.mxu0 0
    %885 = vmatpush2.bf16.msra.mxu0 0
    %886 = vmatprep.subr.bf16.mxu0 0
    %887 = vmatpush2.bf16.msra.mxu0 0
    %888 = vmatprep.subr.bf16.mxu0 0
    %889 = vmatpush2.bf16.msra.mxu0 0
    %890 = vmatprep.subr.bf16.mxu0 0
    %891 = vmatpush2.bf16.msra.mxu0 0
    %892 = vmatprep.subr.bf16.mxu0 0
    %893 = vmatpush2.bf16.msra.mxu0 0
    %894 = vmatprep.mubr.bf16.mxu0 0
    %895 = vmatmul.mubr.bf16.gmra.mxu0 %v317
    %v896 = vpop.f32.mrf.mxu0
    %v897 = vadd.f32 0.0, %v896
    %v898 = vpop.f32.mrf.mxu0
    %v899 = vpop.f32.mrf.mxu0
    %v900 = vadd.f32 0.0, %v899
    %v901 = vpop.f32.mrf.mxu0
    %902 = vmatprep.mubr.bf16.mxu0 0
    %903 = vmatmul.mubr.bf16.gmra.mxu0 %v320
    %v904 = vpop.f32.mrf.mxu0
    %v905 = vadd.f32 0.0, %v904
    %v906 = vpop.f32.mrf.mxu0
    %v907 = vpop.f32.mrf.mxu0
    %v908 = vadd.f32 0.0, %v907
    %v909 = vpop.f32.mrf.mxu0
    %910 = vdwg.mxu0
    %v911 = vadd.f32 %v565, %v897
    %v912 = vadd.f32 %v566, %v900
    %v913 = vadd.f32 %v567, %v905
    %v914 = vadd.f32 %v568, %v908
    %915 = vst [vmem:[#allocation13] sm:$0xff] %v744
    %916 = vst [vmem:[#allocation13 + $0x8] sm:$0xff] %v745
    %917 = vst [vmem:[#allocation14] sm:$0xff] %v911
    %918 = vst [vmem:[#allocation14 + $0x8] sm:$0xff] %v912
    %919 = vst [vmem:[#allocation14 + $0x10] sm:$0xff] %v913
    %920 = vst [vmem:[#allocation14 + $0x18] sm:$0xff] %v914
    // Predicated region
    $region78: #{tpu_custom_call.1} parent=1 // pred_check
      _
    $region79: #{tpu_custom_call.1} parent=1 // pred_check_branch
      %922 = sbr.rel (0) target = $region81
    $region80: #{tpu_custom_call.1} parent=1 // pred_region
      %s924 = ssub.s32 256, 256
      %925 = vsyncadd [#allocation4], %s924
      %s926 = sshll.u32 [#allocation13], 4
      %s927 = int_to_ptr.vmem [resolvable:$true] %s926
      %932 = dma.vmem_to_hbm [thread:$0]  %s927, 256, %s13, [#allocation4], 128, 128, 8
    $region81: #{tpu_custom_call.1} parent=1 // pred_fallthru
      _
    // Predicated region
    $region82: #{tpu_custom_call.1} parent=1 // pred_check
      _
    $region83: #{tpu_custom_call.1} parent=1 // pred_check_branch
      %934 = sbr.rel (0) target = $region85
    $region84: #{tpu_custom_call.1} parent=1 // pred_region
      %s936 = ssub.s32 512, 512
      %937 = vsyncadd [#allocation15], %s936
      %s938 = sshll.u32 [#allocation14], 4
      %s939 = int_to_ptr.vmem [resolvable:$true] %s938
      %944 = dma.vmem_to_hbm [thread:$0]  %s939, 512, %s14, [#allocation15], 128, 128, 8
    $region85: #{tpu_custom_call.1} parent=1 // pred_fallthru
      _
    // Predicated region
    $region86: #{tpu_custom_call.1} parent=1 // pred_check
      _
    $region87: #{tpu_custom_call.1} parent=1 // pred_check_branch
      %946 = sbr.rel (0) target = $region89
    $region88: #{tpu_custom_call.1} parent=1 // pred_region
      %947 = dma.done [#allocation4], 256
    $region89: #{tpu_custom_call.1} parent=1 // pred_fallthru
      _
    // Predicated region
    $region90: #{tpu_custom_call.1} parent=1 // pred_check
      _
    $region91: #{tpu_custom_call.1} parent=1 // pred_check_branch
      %949 = sbr.rel (0) target = $region93
    $region92: #{tpu_custom_call.1} parent=1 // pred_region
      %950 = dma.done [#allocation15], 512
    $region93: #{tpu_custom_call.1} parent=1 // pred_fallthru
      _
    %951 = vsyncpa [#allocation3], 1
    %952 = vsyncpa [#allocation6], 1
    %953 = vsyncpa [#allocation9], 1
    %954 = vsyncpa [#allocation12], 1
    %955 = vsyncpa [#allocation4], 1
    %956 = vsyncpa [#allocation15], 1

</llo_original>
